<compile_context>
chip_gen: v5e
topology: v5e:2x2
jax: 0.10.0
libtpu: 0.0.40
codegen_flags: <defaults>
</compile_context>

<pallas_src>
import functools

import jax
import jax.numpy as jnp
from jax.experimental import pallas as pl
from jax.experimental.pallas import tpu as pltpu

LANE = 128        # TPU lane width (last dim)
ROW_ALIGN = 16    # bf16 packs 16 rows per vreg sublane group


def _round_up(n, m):
    return ((n + m - 1) // m) * m


def _num_tensorcores_per_chip():
    """2 on v7x (megacore), 1 on v5e/v6e.  Best-effort trace-time query."""
    try:
        kind = (jax.devices()[0].device_kind or "").lower()
    except Exception:
        return 1
    return 2 if "v7" in kind else 1


_N_TC = _num_tensorcores_per_chip()


def _qnn_kernel(x_ref, w1_ref, b1_ref, w2_ref, b2_ref, w3_ref, b3_ref, o_ref):
    """fc1 -> ReLU -> fc2 -> ReLU -> fc3, fully fused.

    Matmul inputs are bf16 (native MXU throughput); accumulation, bias-add and
    ReLU happen in f32 (v5e VPU has no bf16).  Only the final store is bf16.
    """
    # In-kernel cast of the f32 state tile to bf16 (tiny (block_b, S) tile -> ~free).
    x = x_ref[...].astype(jnp.bfloat16)

    # NOTE: layer 1 has K = state_size (tiny); an 8-term VPU FMA chain could keep the
    # MXU free here, but the kernel is overhead/HBM-bound, so this stays on the MXU.
    h1 = jnp.dot(x, w1_ref[...], preferred_element_type=jnp.float32) + b1_ref[...]
    h1 = jnp.maximum(h1, 0.0).astype(jnp.bfloat16)

    h2 = jnp.dot(h1, w2_ref[...], preferred_element_type=jnp.float32) + b2_ref[...]
    h2 = jnp.maximum(h2, 0.0).astype(jnp.bfloat16)

    # Lane-dense (block_b, 128) output block; f32 accumulate + bias, bf16 store
    # (halves the padded-output HBM writeback, which dominates at large B).
    out = jnp.dot(h2, w3_ref[...], preferred_element_type=jnp.float32) + b3_ref[...]
    o_ref[...] = out.astype(jnp.bfloat16)


def _pick_block_b(B):
    """Batch tile size: fill the MXU M dim, amortize per-step overhead, and on v7x
    guarantee >= 2 parallel grid steps for mid-size batches so both TCs get work."""
    if B <= 256:
        if _N_TC >= 2 and B >= 64:
            return _round_up(pl.cdiv(B, 2), ROW_ALIGN)   # 2 tiles -> both v7x cores
        return _round_up(B, ROW_ALIGN)                   # single tile on v5e/v6e
    if B <= 1024:
        return 256
    if B <= 2048:
        return 512
    return 1024


@functools.partial(jax.jit, static_argnames=("action_size",))
def qnn_forward(state, kernel_params, action_size):
    """state: [B, state_size] float32; kernel_params from prepare_qnn_params.
    Returns [B, action_size] float32."""
    w1, b1, w2, b2, w3, b3 = kernel_params
    B, S = state.shape
    H1 = w1.shape[1]
    H2 = w2.shape[1]
    A_pad = w3.shape[1]          # lane-padded action dim (multiple of 128)

    block_b = _pick_block_b(B)
    B_pad = _round_up(B, block_b)

    x = state
    if B_pad != B:
        x = jnp.pad(x, ((0, B_pad - B), (0, 0)))   # pad only when needed

    grid = (B_pad // block_b,)

    # Weights/biases use constant index_maps -> DMA'd once and kept resident across
    # grid steps.  Default double-buffering of these ~70 KB constants is kept for
    # compile-safety (pl.Buffered(1) would only reclaim ~140 KB of VMEM).
    in_specs = [
        pl.BlockSpec((block_b, S), lambda i: (i, 0)),   # x tile (batch-tiled, f32)
        pl.BlockSpec((S, H1), lambda i: (0, 0)),        # w1 (bf16)
        pl.BlockSpec((1, H1), lambda i: (0, 0)),        # b1 (f32)
        pl.BlockSpec((H1, H2), lambda i: (0, 0)),       # w2 (bf16)
        pl.BlockSpec((1, H2), lambda i: (0, 0)),        # b2 (f32)
        pl.BlockSpec((H2, A_pad), lambda i: (0, 0)),    # w3 (bf16, lane-padded)
        pl.BlockSpec((1, A_pad), lambda i: (0, 0)),     # b3 (f32, lane-padded)
    ]
    out_spec = pl.BlockSpec((block_b, A_pad), lambda i: (i, 0))

    out_padded = pl.pallas_call(
        _qnn_kernel,
        out_shape=jax.ShapeDtypeStruct((B_pad, A_pad), jnp.bfloat16),
        grid_spec=pltpu.PrefetchScalarGridSpec(
            num_scalar_prefetch=0,
            grid=grid,
            in_specs=in_specs,
            out_specs=out_spec,
        ),
        compiler_params=pltpu.CompilerParams(
            dimension_semantics=("parallel",),   # batch tiles are independent -> megacore
        ),
    )(x, w1, b1, w2, b2, w3, b3)

    # TODO(synk): for B >= ~16K eval sweeps, lane-pack the 4 real action columns of
    # 32 consecutive rows inside the kernel to cut writeback ~32x (not worth it for RL
    # inference batches).
    return out_padded[:B, :action_size].astype(jnp.float32)


def init_qnn_params(key, state_size, action_size, hidden=128):
    """Deterministic init mimicking nn.Linear default: U(-1/sqrt(fan_in), 1/sqrt(fan_in)).
    Returns fp32 params with weights stored [in, out]."""
    def linear(key, fan_in, fan_out):
        kw, kb = jax.random.split(key)
        bound = 1.0 / jnp.sqrt(jnp.float32(fan_in))
        w = jax.random.uniform(kw, (fan_in, fan_out), jnp.float32, -bound, bound)
        b = jax.random.uniform(kb, (1, fan_out), jnp.float32, -bound, bound)
        return w, b

    k1, k2, k3 = jax.random.split(key, 3)
    w1, b1 = linear(k1, state_size, hidden)
    w2, b2 = linear(k2, hidden, hidden)
    w3, b3 = linear(k3, hidden, action_size)
    return (w1, b1, w2, b2, w3, b3)


def prepare_qnn_params(params):
    """One-time conversion for the kernel: bf16 weights (f32 biases) and lane-padded
    final layer (w3 -> [H2, 128*k], b3 -> [1, 128*k], zero-filled)."""
    w1, b1, w2, b2, w3, b3 = params
    H2, A = w3.shape
    A_pad = _round_up(max(A, LANE), LANE)
    w3p = jnp.zeros((H2, A_pad), jnp.bfloat16).at[:, :A].set(w3.astype(jnp.bfloat16))
    b3p = jnp.zeros((1, A_pad), jnp.float32).at[:, :A].set(b3)
    return (w1.astype(jnp.bfloat16), b1.astype(jnp.float32),
            w2.astype(jnp.bfloat16), b2.astype(jnp.float32),
            w3p, b3p)


def qnn_reference(state, params):
    """Pure-JAX fp32 reference of QNN.forward for correctness checking."""
    w1, b1, w2, b2, w3, b3 = params
    x = jnp.maximum(state @ w1 + b1, 0.0)
    x = jnp.maximum(x @ w2 + b2, 0.0)
    return x @ w3 + b3


if __name__ == "__main__":
    key = jax.random.PRNGKey(0)
    k_param, k_state = jax.random.split(key)

    state_size = 8      # e.g. LunarLander-like small state
    action_size = 4
    batch = 16

    params = init_qnn_params(k_param, state_size, action_size, hidden=128)
    kernel_params = prepare_qnn_params(params)

    state = jax.random.normal(k_state, (batch, state_size), jnp.float32)
    out = jax.block_until_ready(qnn_forward(state, kernel_params, action_size))
    ref = qnn_reference(state, params)
    assert out.shape == (batch, action_size)
    assert out.dtype == jnp.float32
    # bf16 matmul inputs + bf16 output store with f32 accumulation -> relaxed tolerance
    assert jnp.allclose(out, ref, atol=3e-2, rtol=3e-2), "mismatch vs reference"

    # Odd batch size exercises the wrapper-side batch padding (no hard divisibility assert).
    state_odd = jax.random.normal(k_state, (5, state_size), jnp.float32)
    out_odd = jax.block_until_ready(qnn_forward(state_odd, kernel_params, action_size))
    ref_odd = qnn_reference(state_odd, params)
    assert out_odd.shape == (5, action_size)
    assert jnp.allclose(out_odd, ref_odd, atol=3e-2, rtol=3e-2), "mismatch vs reference (odd batch)"

    print("KERNEL_OK")
</pallas_src>

<mosaic_0001>
module attributes {stable_mosaic.version = 11 : i64} {
  func.func @_qnn_kernel(%arg0: i32, %arg1: memref<16x8xf32, #tpu.memory_space<vmem>>, %arg2: memref<8x128xbf16, #tpu.memory_space<vmem>>, %arg3: memref<1x128xf32, #tpu.memory_space<vmem>>, %arg4: memref<128x128xbf16, #tpu.memory_space<vmem>>, %arg5: memref<1x128xf32, #tpu.memory_space<vmem>>, %arg6: memref<128x128xbf16, #tpu.memory_space<vmem>>, %arg7: memref<1x128xf32, #tpu.memory_space<vmem>>, %arg8: memref<16x128xbf16, #tpu.memory_space<vmem>>) attributes {dimension_semantics = [#tpu.dimension_semantics<parallel>], iteration_bounds = array<i64: 1>, scalar_prefetch = 0 : i64, scratch_operands = 0 : i64, tpu.core_type = #tpu.core_type<tc>, window_params = [{transform_indices = @transform_0, window_bounds = array<i64: 16, 8>}, {pipeline_mode = #tpu.pipeline_mode<synchronous>, transform_indices = @transform_1, window_bounds = array<i64: 8, 128>}, {pipeline_mode = #tpu.pipeline_mode<synchronous>, transform_indices = @transform_2, window_bounds = array<i64: 1, 128>}, {pipeline_mode = #tpu.pipeline_mode<synchronous>, transform_indices = @transform_3, window_bounds = array<i64: 128, 128>}, {pipeline_mode = #tpu.pipeline_mode<synchronous>, transform_indices = @transform_4, window_bounds = array<i64: 1, 128>}, {pipeline_mode = #tpu.pipeline_mode<synchronous>, transform_indices = @transform_5, window_bounds = array<i64: 128, 128>}, {pipeline_mode = #tpu.pipeline_mode<synchronous>, transform_indices = @transform_6, window_bounds = array<i64: 1, 128>}, {transform_indices = @transform_7, window_bounds = array<i64: 16, 128>}]} {
    %c0 = arith.constant 0 : index
    %c0_0 = arith.constant 0 : index
    %0 = vector.load %arg1[%c0, %c0_0] : memref<16x8xf32, #tpu.memory_space<vmem>>, vector<16x8xf32>
    %1 = arith.truncf %0 : vector<16x8xf32> to vector<16x8xbf16>
    %c0_1 = arith.constant 0 : index
    %c0_2 = arith.constant 0 : index
    %2 = vector.load %arg2[%c0_1, %c0_2] : memref<8x128xbf16, #tpu.memory_space<vmem>>, vector<8x128xbf16>
    %cst = arith.constant dense<0.000000e+00> : vector<16x128xf32>
    %3 = tpu.matmul %1, %2, %cst {dimension_numbers = #tpu.dot_dimension_numbers<[1], [0], [0], [1], [0, 0, 1, 1], [], []>} : vector<16x8xbf16>, vector<8x128xbf16>, vector<16x128xf32> -> vector<16x128xf32>
    %c0_3 = arith.constant 0 : index
    %c0_4 = arith.constant 0 : index
    %4 = vector.load %arg3[%c0_3, %c0_4] : memref<1x128xf32, #tpu.memory_space<vmem>>, vector<1x128xf32>
    %5 = vector.broadcast %4 : vector<1x128xf32> to vector<16x128xf32>
    %6 = arith.addf %3, %5 : vector<16x128xf32>
    %cst_5 = arith.constant 0.000000e+00 : f32
    %7 = vector.broadcast %cst_5 : f32 to vector<16x128xf32>
    %8 = arith.maximumf %6, %7 : vector<16x128xf32>
    %9 = arith.truncf %8 : vector<16x128xf32> to vector<16x128xbf16>
    %c0_6 = arith.constant 0 : index
    %c0_7 = arith.constant 0 : index
    %10 = vector.load %arg4[%c0_6, %c0_7] : memref<128x128xbf16, #tpu.memory_space<vmem>>, vector<128x128xbf16>
    %cst_8 = arith.constant dense<0.000000e+00> : vector<16x128xf32>
    %11 = tpu.matmul %9, %10, %cst_8 {dimension_numbers = #tpu.dot_dimension_numbers<[1], [0], [0], [1], [0, 0, 1, 1], [], []>} : vector<16x128xbf16>, vector<128x128xbf16>, vector<16x128xf32> -> vector<16x128xf32>
    %c0_9 = arith.constant 0 : index
    %c0_10 = arith.constant 0 : index
    %12 = vector.load %arg5[%c0_9, %c0_10] : memref<1x128xf32, #tpu.memory_space<vmem>>, vector<1x128xf32>
    %13 = vector.broadcast %12 : vector<1x128xf32> to vector<16x128xf32>
    %14 = arith.addf %11, %13 : vector<16x128xf32>
    %cst_11 = arith.constant 0.000000e+00 : f32
    %15 = vector.broadcast %cst_11 : f32 to vector<16x128xf32>
    %16 = arith.maximumf %14, %15 : vector<16x128xf32>
    %17 = arith.truncf %16 : vector<16x128xf32> to vector<16x128xbf16>
    %c0_12 = arith.constant 0 : index
    %c0_13 = arith.constant 0 : index
    %18 = vector.load %arg6[%c0_12, %c0_13] : memref<128x128xbf16, #tpu.memory_space<vmem>>, vector<128x128xbf16>
    %cst_14 = arith.constant dense<0.000000e+00> : vector<16x128xf32>
    %19 = tpu.matmul %17, %18, %cst_14 {dimension_numbers = #tpu.dot_dimension_numbers<[1], [0], [0], [1], [0, 0, 1, 1], [], []>} : vector<16x128xbf16>, vector<128x128xbf16>, vector<16x128xf32> -> vector<16x128xf32>
    %c0_15 = arith.constant 0 : index
    %c0_16 = arith.constant 0 : index
    %20 = vector.load %arg7[%c0_15, %c0_16] : memref<1x128xf32, #tpu.memory_space<vmem>>, vector<1x128xf32>
    %21 = vector.broadcast %20 : vector<1x128xf32> to vector<16x128xf32>
    %22 = arith.addf %19, %21 : vector<16x128xf32>
    %23 = arith.truncf %22 : vector<16x128xf32> to vector<16x128xbf16>
    %c0_17 = arith.constant 0 : index
    %c0_18 = arith.constant 0 : index
    %24 = vector.load %arg8[%c0_17, %c0_18] : memref<16x128xbf16, #tpu.memory_space<vmem>>, vector<16x128xbf16>
    tpu.vector_store %arg8[%c0_17, %c0_18], %23 {strides = array<i32>} : memref<16x128xbf16, #tpu.memory_space<vmem>>, vector<16x128xbf16>,
    return
  }
  func.func @transform_0(%arg0: i32) -> (i32, i32) {
    %c0_i32 = arith.constant 0 : i32
    %c0_i32_0 = arith.constant 0 : i32
    return %arg0, %c0_i32 : i32, i32
  }
  func.func @transform_1(%arg0: i32) -> (i32, i32) {
    %c0_i32 = arith.constant 0 : i32
    %c0_i32_0 = arith.constant 0 : i32
    %c0_i32_1 = arith.constant 0 : i32
    return %c0_i32, %c0_i32_0 : i32, i32
  }
  func.func @transform_2(%arg0: i32) -> (i32, i32) {
    %c0_i32 = arith.constant 0 : i32
    %c0_i32_0 = arith.constant 0 : i32
    %c0_i32_1 = arith.constant 0 : i32
    return %c0_i32, %c0_i32_0 : i32, i32
  }
  func.func @transform_3(%arg0: i32) -> (i32, i32) {
    %c0_i32 = arith.constant 0 : i32
    %c0_i32_0 = arith.constant 0 : i32
    %c0_i32_1 = arith.constant 0 : i32
    return %c0_i32, %c0_i32_0 : i32, i32
  }
  func.func @transform_4(%arg0: i32) -> (i32, i32) {
    %c0_i32 = arith.constant 0 : i32
    %c0_i32_0 = arith.constant 0 : i32
    %c0_i32_1 = arith.constant 0 : i32
    return %c0_i32, %c0_i32_0 : i32, i32
  }
  func.func @transform_5(%arg0: i32) -> (i32, i32) {
    %c0_i32 = arith.constant 0 : i32
    %c0_i32_0 = arith.constant 0 : i32
    %c0_i32_1 = arith.constant 0 : i32
    return %c0_i32, %c0_i32_0 : i32, i32
  }
  func.func @transform_6(%arg0: i32) -> (i32, i32) {
    %c0_i32 = arith.constant 0 : i32
    %c0_i32_0 = arith.constant 0 : i32
    %c0_i32_1 = arith.constant 0 : i32
    return %c0_i32, %c0_i32_0 : i32, i32
  }
  func.func @transform_7(%arg0: i32) -> (i32, i32) {
    %c0_i32 = arith.constant 0 : i32
    %c0_i32_0 = arith.constant 0 : i32
    return %arg0, %c0_i32 : i32, i32
  }
}

</mosaic_0001>

<llo_original>
// kernel: qnn_forward.1
$region0: #{qnn_forward.1}
  #allocation0 [shape = 'u32[]', space=smem, size = 0x4, offset = 0x4, fixed_abs, tag = 'smem constant byte address 0x4 - core index']
  #allocation1 [shape = 'u32[72,128]{1,0:T(1,128)}', space=vmem, size = 0x9000, scoped, tag = 'internal scratch']
  %s0 = inlined_call_operand.vmem [shape: f32[16,8], index: 0, kind: input, shape index: {}]
  %s1 = inlined_call_operand.vmem [shape: bf16[8,128], index: 1, kind: input, shape index: {}]
  %s2 = inlined_call_operand.vmem [shape: f32[1,128], index: 2, kind: input, shape index: {}]
  %s3 = inlined_call_operand.hbm [shape: bf16[128,128], index: 3, kind: input, shape index: {}]
  %s4 = inlined_call_operand.vmem [shape: f32[1,128], index: 4, kind: input, shape index: {}]
  %s5 = inlined_call_operand.hbm [shape: bf16[128,128], index: 5, kind: input, shape index: {}]
  %s6 = inlined_call_operand.vmem [shape: f32[1,128], index: 6, kind: input, shape index: {}]
  %s7 = inlined_call_operand.vmem [shape: bf16[16,128], index: 7, kind: output, shape index: {}]
  %s8 = sld [smem:[#allocation0]]
  $region46: #{qnn_forward.1} parent=0
    _
  %s10 = ssub.s32 1, %s8
  %s11 = scalar_select 0, %s10, %s8
  $region1: #{qnn_forward.1} parent=0
    #allocation2 [shape = 'u8[32768]{0}', space=vmem, size = 0x8000, scoped, tag = 'input window, operand 3, single buffered']
    #allocation3 [shape = 's32[1]{0}', space=sflag, size = 0x4, scoped, tag = 'scoped memory for qnn_forward.1']
    #allocation4 [shape = 'u8[32768]{0}', space=vmem, size = 0x8000, scoped, tag = 'input window, operand 5, single buffered']
    #allocation5 [shape = 's32[1]{0}', space=sflag, size = 0x4, scoped, tag = 'scoped memory for qnn_forward.1']
    %12 = vsyncpa [#allocation3], 0
    %13 = vsyncpa [#allocation5], 0
    // Predicated region
    $region2: #{qnn_forward.1} parent=1 // pred_check
      _
    $region3: #{qnn_forward.1} parent=1 // pred_check_branch
      %15 = sbr.rel (0) target = $region5
    $region4: #{qnn_forward.1} parent=1 // pred_region
      _
    $region5: #{qnn_forward.1} parent=1 // pred_fallthru
      _
    // Predicated region
    $region6: #{qnn_forward.1} parent=1 // pred_check
      _
    $region7: #{qnn_forward.1} parent=1 // pred_check_branch
      %17 = sbr.rel (0) target = $region9
    $region8: #{qnn_forward.1} parent=1 // pred_region
      _
    $region9: #{qnn_forward.1} parent=1 // pred_fallthru
      _
    // Predicated region
    $region10: #{qnn_forward.1} parent=1 // pred_check
      _
    $region11: #{qnn_forward.1} parent=1 // pred_check_branch
      %19 = sbr.rel (0) target = $region13
    $region12: #{qnn_forward.1} parent=1 // pred_region
      _
    $region13: #{qnn_forward.1} parent=1 // pred_fallthru
      _
    // Predicated region
    $region14: #{qnn_forward.1} parent=1 // pred_check
      _
    $region15: #{qnn_forward.1} parent=1 // pred_check_branch
      %21 = sbr.rel (0) target = $region17
    $region16: #{qnn_forward.1} parent=1 // pred_region
      %23 = vsyncadd [#allocation3], 0
      %s24 = sshll.u32 %s3, 4
      %s25 = int_to_ptr.hbm [resolvable:$true] %s24
      %s26 = sshll.u32 [#allocation2], 4
      %s27 = int_to_ptr.vmem [resolvable:$true] %s26
      %32 = dma.hbm_to_vmem [thread:$0]  %s25, 1024, %s27, [#allocation3], 64, 64, 4
    $region17: #{qnn_forward.1} parent=1 // pred_fallthru
      _
    // Predicated region
    $region18: #{qnn_forward.1} parent=1 // pred_check
      _
    $region19: #{qnn_forward.1} parent=1 // pred_check_branch
      %34 = sbr.rel (0) target = $region21
    $region20: #{qnn_forward.1} parent=1 // pred_region
      _
    $region21: #{qnn_forward.1} parent=1 // pred_fallthru
      _
    // Predicated region
    $region22: #{qnn_forward.1} parent=1 // pred_check
      _
    $region23: #{qnn_forward.1} parent=1 // pred_check_branch
      %36 = sbr.rel (0) target = $region25
    $region24: #{qnn_forward.1} parent=1 // pred_region
      %38 = vsyncadd [#allocation5], 0
      %s39 = sshll.u32 %s5, 4
      %s40 = int_to_ptr.hbm [resolvable:$true] %s39
      %s41 = sshll.u32 [#allocation4], 4
      %s42 = int_to_ptr.vmem [resolvable:$true] %s41
      %47 = dma.hbm_to_vmem [thread:$0]  %s40, 1024, %s42, [#allocation5], 64, 64, 4
    $region25: #{qnn_forward.1} parent=1 // pred_fallthru
      _
    // Predicated region
    $region26: #{qnn_forward.1} parent=1 // pred_check
      _
    $region27: #{qnn_forward.1} parent=1 // pred_check_branch
      %49 = sbr.rel (0) target = $region29
    $region28: #{qnn_forward.1} parent=1 // pred_region
      _
    $region29: #{qnn_forward.1} parent=1 // pred_fallthru
      _
    // Predicated region
    $region30: #{qnn_forward.1} parent=1 // pred_check
      _
    $region31: #{qnn_forward.1} parent=1 // pred_check_branch
      %51 = sbr.rel (0) target = $region33
    $region32: #{qnn_forward.1} parent=1 // pred_region
      %53 = dma.done [#allocation3], 1024
    $region33: #{qnn_forward.1} parent=1 // pred_fallthru
      _
    // Predicated region
    $region34: #{qnn_forward.1} parent=1 // pred_check
      _
    $region35: #{qnn_forward.1} parent=1 // pred_check_branch
      %55 = sbr.rel (0) target = $region37
    $region36: #{qnn_forward.1} parent=1 // pred_region
      %57 = dma.done [#allocation5], 1024
    $region37: #{qnn_forward.1} parent=1 // pred_fallthru
      _
    %v59 = vld [vmem:[%s0] sm:$0xff]
    %v60 = vld [vmem:[%s0 + $0x8] sm:$0xff]
    %v61 = vpack.c.bf16 %v60, %v59
    %v62 = vld [vmem:[%s1] sm:$0xf]
    %v63 = vld [vmem:[%s2] sm:$0x1]
    %v65 = vperm.slane %v63, 0
    %vm67 = vcmask 64512
    %v69 = vsel %vm67, %v61, 0
    %vm71 = vcmask 1043456
    %v73 = vsel %vm71, %v62, 0
    %75 = vmatpush.bf16.msra.mxu0 0
    %76 = vmatpush.bf16.msra.mxu0 0
    %77 = vmatpush.bf16.msra.mxu0 0
    %78 = vmatpush.bf16.msra.mxu0 0
    %79 = vmatpush.bf16.msra.mxu0 0
    %80 = vmatpush.bf16.msra.mxu0 0
    %81 = vmatpush.bf16.msra.mxu0 0
    %82 = vmatpush.bf16.msra.mxu0 %v73
    %83 = vmatmul.bf16.gmra.mxu0 %v69
    %v84 = vpop.f32.mrf.mxu0
    %v85 = vadd.f32 %v65, %v84
    %v86 = vpop.f32.mrf.mxu0
    %v87 = vadd.f32 %v65, %v86
    %88 = vdwg.mxu0
    %v89 = vmax.f32 %v85, 0.0
    %v90 = vmax.f32 %v87, 0.0
    %v91 = vpack.c.bf16 %v90, %v89
    %v92 = vld [vmem:[#allocation2] sm:$0xf]
    %v93 = vld [vmem:[#allocation2 + $0x4] sm:$0xf]
    %v94 = vld [vmem:[#allocation2 + $0x8] sm:$0xf]
    %v95 = vld [vmem:[#allocation2 + $0xc] sm:$0xf]
    %v96 = vld [vmem:[#allocation2 + $0x10] sm:$0xf]
    %v97 = vld [vmem:[#allocation2 + $0x14] sm:$0xf]
    %v98 = vld [vmem:[#allocation2 + $0x18] sm:$0xf]
    %v99 = vld [vmem:[#allocation2 + $0x1c] sm:$0xf]
    %v100 = vld [vmem:[#allocation2 + $0x20] sm:$0xf]
    %v101 = vld [vmem:[#allocation2 + $0x24] sm:$0xf]
    %v102 = vld [vmem:[#allocation2 + $0x28] sm:$0xf]
    %v103 = vld [vmem:[#allocation2 + $0x2c] sm:$0xf]
    %v104 = vld [vmem:[#allocation2 + $0x30] sm:$0xf]
    %v105 = vld [vmem:[#allocation2 + $0x34] sm:$0xf]
    %v106 = vld [vmem:[#allocation2 + $0x38] sm:$0xf]
    %v107 = vld [vmem:[#allocation2 + $0x3c] sm:$0xf]
    %v108 = vld [vmem:[%s4] sm:$0x1]
    %v110 = vperm.slane %v108, 0
    %v128 = vunpack.c.l.b16 %v92
    %v129 = vunpack.c.l.b16 %v93
    %v130 = vunpack.c.l.b16 %v94
    %v131 = vunpack.c.l.b16 %v95
    %v132 = vunpack.c.l.b16 %v96
    %v133 = vunpack.c.l.b16 %v97
    %v134 = vunpack.c.l.b16 %v98
    %v135 = vunpack.c.l.b16 %v99
    %v136 = vunpack.c.l.b16 %v100
    %v137 = vunpack.c.l.b16 %v101
    %v138 = vunpack.c.l.b16 %v102
    %v139 = vunpack.c.l.b16 %v103
    %v140 = vunpack.c.l.b16 %v104
    %v141 = vunpack.c.l.b16 %v105
    %v142 = vunpack.c.l.b16 %v106
    %v143 = vunpack.c.l.b16 %v107
    %v144 = vpack.c.b16 %v129, %v128
    %v145 = vpack.c.b16 %v131, %v130
    %v146 = vpack.c.b16 %v133, %v132
    %v147 = vpack.c.b16 %v135, %v134
    %v148 = vpack.c.b16 %v137, %v136
    %v149 = vpack.c.b16 %v139, %v138
    %v150 = vpack.c.b16 %v141, %v140
    %v151 = vpack.c.b16 %v143, %v142
    %160 = vmatpush.bf16.msra.mxu0 %v151
    %161 = vmatpush.bf16.msra.mxu0 %v150
    %162 = vmatpush.bf16.msra.mxu0 %v149
    %163 = vmatpush.bf16.msra.mxu0 %v148
    %164 = vmatpush.bf16.msra.mxu0 %v147
    %165 = vmatpush.bf16.msra.mxu0 %v146
    %166 = vmatpush.bf16.msra.mxu0 %v145
    %167 = vmatpush.bf16.msra.mxu0 %v144
    %168 = vmatmul.bf16.gmra.mxu0 %v91
    %v169 = vpop.f32.mrf.mxu0
    %v170 = vadd.f32 %v110, %v169
    %v171 = vpop.f32.mrf.mxu0
    %v172 = vadd.f32 %v110, %v171
    %173 = vdwg.mxu0
    %v174 = vmax.f32 %v170, 0.0
    %v175 = vmax.f32 %v172, 0.0
    %v176 = vpack.c.bf16 %v175, %v174
    %v177 = vld [vmem:[#allocation4] sm:$0xf]
    %v178 = vld [vmem:[#allocation4 + $0x4] sm:$0xf]
    %v179 = vld [vmem:[#allocation4 + $0x8] sm:$0xf]
    %v180 = vld [vmem:[#allocation4 + $0xc] sm:$0xf]
    %v181 = vld [vmem:[#allocation4 + $0x10] sm:$0xf]
    %v182 = vld [vmem:[#allocation4 + $0x14] sm:$0xf]
    %v183 = vld [vmem:[#allocation4 + $0x18] sm:$0xf]
    %v184 = vld [vmem:[#allocation4 + $0x1c] sm:$0xf]
    %v185 = vld [vmem:[#allocation4 + $0x20] sm:$0xf]
    %v186 = vld [vmem:[#allocation4 + $0x24] sm:$0xf]
    %v187 = vld [vmem:[#allocation4 + $0x28] sm:$0xf]
    %v188 = vld [vmem:[#allocation4 + $0x2c] sm:$0xf]
    %v189 = vld [vmem:[#allocation4 + $0x30] sm:$0xf]
    %v190 = vld [vmem:[#allocation4 + $0x34] sm:$0xf]
    %v191 = vld [vmem:[#allocation4 + $0x38] sm:$0xf]
    %v192 = vld [vmem:[#allocation4 + $0x3c] sm:$0xf]
    %v193 = vld [vmem:[%s6] sm:$0x1]
    %v195 = vperm.slane %v193, 0
    %v213 = vunpack.c.l.b16 %v177
    %v214 = vunpack.c.l.b16 %v178
    %v215 = vunpack.c.l.b16 %v179
    %v216 = vunpack.c.l.b16 %v180
    %v217 = vunpack.c.l.b16 %v181
    %v218 = vunpack.c.l.b16 %v182
    %v219 = vunpack.c.l.b16 %v183
    %v220 = vunpack.c.l.b16 %v184
    %v221 = vunpack.c.l.b16 %v185
    %v222 = vunpack.c.l.b16 %v186
    %v223 = vunpack.c.l.b16 %v187
    %v224 = vunpack.c.l.b16 %v188
    %v225 = vunpack.c.l.b16 %v189
    %v226 = vunpack.c.l.b16 %v190
    %v227 = vunpack.c.l.b16 %v191
    %v228 = vunpack.c.l.b16 %v192
    %v229 = vpack.c.b16 %v214, %v213
    %v230 = vpack.c.b16 %v216, %v215
    %v231 = vpack.c.b16 %v218, %v217
    %v232 = vpack.c.b16 %v220, %v219
    %v233 = vpack.c.b16 %v222, %v221
    %v234 = vpack.c.b16 %v224, %v223
    %v235 = vpack.c.b16 %v226, %v225
    %v236 = vpack.c.b16 %v228, %v227
    %245 = vmatpush.bf16.msra.mxu0 %v236
    %246 = vmatpush.bf16.msra.mxu0 %v235
    %247 = vmatpush.bf16.msra.mxu0 %v234
    %248 = vmatpush.bf16.msra.mxu0 %v233
    %249 = vmatpush.bf16.msra.mxu0 %v232
    %250 = vmatpush.bf16.msra.mxu0 %v231
    %251 = vmatpush.bf16.msra.mxu0 %v230
    %252 = vmatpush.bf16.msra.mxu0 %v229
    %253 = vmatmul.bf16.gmra.mxu0 %v176
    %v254 = vpop.f32.mrf.mxu0
    %v255 = vadd.f32 %v195, %v254
    %v256 = vpop.f32.mrf.mxu0
    %v257 = vadd.f32 %v195, %v256
    %258 = vdwg.mxu0
    %v259 = vpack.c.bf16 %v255, %v255
    %v260 = vpack.c.bf16 %v257, %v257
    %261 = vst [vmem:[%s7] sm:$0xf] %v259
    %262 = vst [vmem:[%s7 + $0x4] sm:$0xf] %v260
    // Predicated region
    $region38: #{qnn_forward.1} parent=1 // pred_check
      _
    $region39: #{qnn_forward.1} parent=1 // pred_check_branch
      %264 = sbr.rel (0) target = $region41
    $region40: #{qnn_forward.1} parent=1 // pred_region
      _
    $region41: #{qnn_forward.1} parent=1 // pred_fallthru
      _
    // Predicated region
    $region42: #{qnn_forward.1} parent=1 // pred_check
      _
    $region43: #{qnn_forward.1} parent=1 // pred_check_branch
      %266 = sbr.rel (0) target = $region45
    $region44: #{qnn_forward.1} parent=1 // pred_region
      _
    $region45: #{qnn_forward.1} parent=1 // pred_fallthru
      _
    %267 = vsyncpa [#allocation3], 1
    %268 = vsyncpa [#allocation5], 1

</llo_original>
